<compile_context>
chip_gen: v7x
topology: tpu7x:2x2x1
jax: 0.10.0
libtpu: 0.0.40
codegen_flags: <defaults>
</compile_context>

<pallas_src>
import numpy as np
import jax
import jax.numpy as jnp
from jax.experimental import pallas as pl
from jax.experimental.pallas import tpu as pltpu

B = 16                      # batch
C = 3                       # channels (mean/std are 3-channel ImageNet stats)
HIN, WIN = 8, 8             # incoming spatial size
HOUT, WOUT = 16, 16         # data_config "input_size" the wrapper resizes to
HIDDEN = 32                 # synthetic classifier hidden width
NUM_IMAGENET = 16           # synthetic "imagenet" logit count
NUM_TARGETS = 4             # mapper target classes (contiguous groups)
GROUP = NUM_IMAGENET // NUM_TARGETS

S_IN = HIN * WIN
S_OUT = HOUT * WOUT
D_IN = C * S_IN             # fused input feature width per image (192)

# MXU / lane-aligned padded widths.
D_PAD = 256                 # K dim: 192 -> 256
H_PAD = 128                 # hidden: 32 -> 128
N_PAD = 128                 # logits: 16 -> 128 (lane-dense output)

TB = B                      # single grid step: nothing to pipeline at this scale


def _resize_matrix(out_size, in_size):
    """1-D weights matching F.interpolate(mode='bilinear', align_corners=False)."""
    w = np.zeros((out_size, in_size), dtype=np.float32)
    scale = in_size / out_size
    for o in range(out_size):
        src = max((o + 0.5) * scale - 0.5, 0.0)
        i0 = min(int(np.floor(src)), in_size - 1)
        i1 = min(i0 + 1, in_size - 1)
        lam = src - i0
        w[o, i0] += 1.0 - lam
        w[o, i1] += lam
    return w


# ---------------------------------------------------------------------------
# Pallas kernel: relu(x @ W_fused + b_fused) @ w2 + b2 on padded, aligned tiles.
# Output is the lane-dense (TB, 128) padded logits tile.
# ---------------------------------------------------------------------------
def _wrapper_kernel(x_ref, wf_ref, bf_ref, w2_ref, b2_ref, out_ref):
    # fused resize + normalization + first linear layer:
    # (TB, D_PAD)bf16 @ (D_PAD, H_PAD)bf16, f32 accumulation on the MXU.
    h = jnp.dot(x_ref[...], wf_ref[...],
                preferred_element_type=jnp.float32) + bf_ref[...]
    h = jnp.maximum(h, 0.0).astype(jnp.bfloat16)
    # second linear layer: (TB, H_PAD) @ (H_PAD, N_PAD) -> lane-dense f32 store.
    out_ref[...] = jnp.dot(h, w2_ref[...],
                           preferred_element_type=jnp.float32) + b2_ref[...]


def custom_model_wrapper_forward(x_nchw, fused):
    w_fused, b_fused, w2, b2 = fused
    # NCHW -> (B, C*H*W) (c-major matches the fused-weight layout), pad K to 256, bf16.
    xf = x_nchw.reshape(B, D_IN).astype(jnp.bfloat16)
    xf = jnp.pad(xf, ((0, 0), (0, D_PAD - D_IN)))

    logits_pad = pl.pallas_call(
        _wrapper_kernel,
        out_shape=jax.ShapeDtypeStruct((B, N_PAD), jnp.float32),
        grid_spec=pltpu.PrefetchScalarGridSpec(
            num_scalar_prefetch=0,
            grid=(B // TB,),                                           # == 1 step
            in_specs=[
                pl.BlockSpec((TB, D_PAD), lambda i: (i, 0)),           # x tile
                pl.BlockSpec((D_PAD, H_PAD), lambda i: (0, 0)),        # fused W (resident)
                pl.BlockSpec((1, H_PAD), lambda i: (0, 0)),            # fused bias (f32)
                pl.BlockSpec((H_PAD, N_PAD), lambda i: (0, 0)),        # w2
                pl.BlockSpec((1, N_PAD), lambda i: (0, 0)),            # b2 (f32)
            ],
            out_specs=pl.BlockSpec((TB, N_PAD), lambda i: (i, 0)),
        ),
        compiler_params=pltpu.CompilerParams(
            dimension_semantics=("arbitrary",),
            vmem_limit_bytes=32 * 1024 * 1024),
        cost_estimate=pl.CostEstimate(
            flops=2 * B * (D_PAD * H_PAD + H_PAD * N_PAD),
            transcendentals=0,
            bytes_accessed=(xf.size * 2 + w_fused.size * 2 + w2.size * 2
                            + b_fused.size * 4 + b2.size * 4 + B * N_PAD * 4)),
    )(xf, w_fused, b_fused, w2, b2)

    # mapper style='max': imagenet ids of target t are the contiguous block
    # [t*GROUP, (t+1)*GROUP). Trivial 16->4 reduction; done outside the kernel so the
    # kernel's store stays lane-dense (review item).
    logits = logits_pad[:, :NUM_IMAGENET]
    return jnp.max(logits.reshape(B, NUM_TARGETS, GROUP), axis=-1)


# ---------------------------------------------------------------------------
# Host-side parameter construction + algebraic fusion + padding.
# ---------------------------------------------------------------------------
def make_params():
    # Bilinear resize as one matmul: kron(Wh, Ww) applied to flattened spatial.
    wh = _resize_matrix(HOUT, HIN)
    ww = _resize_matrix(WOUT, WIN)
    k_mat = jnp.asarray(np.kron(wh, ww).T)                                 # (S_IN, S_OUT)

    mean = jnp.asarray(np.array([0.485, 0.456, 0.406], dtype=np.float32))   # (C,)
    std = jnp.asarray(np.array([0.229, 0.224, 0.225], dtype=np.float32))    # (C,)

    # Deterministic synthetic classifier weights (the wrapped `model`).
    k1, k2 = jax.random.split(jax.random.PRNGKey(42))
    w1 = (jax.random.normal(k1, (C, S_OUT, HIDDEN), jnp.float32)
          * (1.0 / np.sqrt(C * S_OUT)))
    b1 = jnp.asarray(0.01 * np.arange(HIDDEN, dtype=np.float32)).reshape(1, HIDDEN)
    w2 = (jax.random.normal(k2, (HIDDEN, NUM_IMAGENET), jnp.float32)
          * (1.0 / np.sqrt(HIDDEN)))
    b2 = jnp.asarray(0.01 * np.arange(NUM_IMAGENET, dtype=np.float32)).reshape(1, NUM_IMAGENET)

    # Mapper: imagenet id i belongs to target class i // GROUP (contiguous groups).
    ids = np.arange(NUM_IMAGENET)
    mask_t = jnp.asarray(
        (ids[None, :] // GROUP == np.arange(NUM_TARGETS)[:, None]).astype(np.float32))

    return (k_mat, mean, std, w1, b1, w2, b2, mask_t)


def fuse_params(params):
    """Fold resize matrix K + per-channel normalization into the first linear layer,
    then zero-pad everything to MXU/lane-aligned tiles and cast weights to bf16."""
    k_mat, mean, std, w1, b1, w2, b2, _ = params
    # W_fused[(c,i), d] = sum_s K[i,s] * w1[c,s,d] / std_c
    kw = jnp.einsum("is,csd->cid", k_mat, w1) / std[:, None, None]          # (C, S_IN, HIDDEN)
    w_fused = kw.reshape(C * S_IN, HIDDEN)
    # b_fused = b1 - sum_c (mean_c / std_c) * sum_s w1[c,s,:]
    b_fused = b1 - jnp.einsum("c,cd->d", mean / std, w1.sum(axis=1))[None, :]

    # Zero padding is exactly neutral: padded K columns of x are 0, padded hidden
    # units get relu(0 + 0) = 0 and have zero rows in w2_p, padded logit lanes are 0
    # and sliced off in the wrapper.
    w_fused_p = jnp.zeros((D_PAD, H_PAD), jnp.float32).at[:D_IN, :HIDDEN].set(w_fused)
    b_fused_p = jnp.zeros((1, H_PAD), jnp.float32).at[:, :HIDDEN].set(b_fused)
    w2_p = jnp.zeros((H_PAD, N_PAD), jnp.float32).at[:HIDDEN, :NUM_IMAGENET].set(w2)
    b2_p = jnp.zeros((1, N_PAD), jnp.float32).at[:, :NUM_IMAGENET].set(b2)

    return (w_fused_p.astype(jnp.bfloat16), b_fused_p,
            w2_p.astype(jnp.bfloat16), b2_p)


def reference_forward(x_nchw, params):
    """Pure-JAX f32 reference mirroring the PyTorch wrapper semantics (unfused)."""
    k_mat, mean, std, w1, b1, w2, b2, mask_t = params
    x2 = x_nchw.reshape(B * C, S_IN).astype(jnp.float32)
    xr = x2 @ k_mat                                                        # bilinear resize
    xn = xr.reshape(B, C, S_OUT)
    xn = (xn - mean[None, :, None]) / std[None, :, None]                   # normalization
    h = jnp.einsum("bcs,csd->bd", xn, w1) + b1
    h = jnp.maximum(h, 0.0)
    logits = h @ w2 + b2
    masked = jnp.where(mask_t[None] > 0.5, logits[:, None, :], -jnp.inf)   # mapper 'max'
    return jnp.max(masked, axis=-1)


if __name__ == "__main__":
    params = make_params()
    fused = fuse_params(params)

    # Image-like input in [0, 1], NCHW.
    x = jax.random.uniform(jax.random.PRNGKey(0), (B, C, HIN, WIN), jnp.float32)

    y = custom_model_wrapper_forward(x, fused)
    y = jax.block_until_ready(y)

    y_ref = jax.block_until_ready(reference_forward(x, params))
    # bf16 kernel operands (f32 accumulation) vs. f32 reference -> 2e-2 tolerance.
    np.testing.assert_allclose(np.asarray(y), np.asarray(y_ref), rtol=2e-2, atol=2e-2)
    assert y.shape == (B, NUM_TARGETS) and y.dtype == jnp.float32

    print("KERNEL_OK")
</pallas_src>

<mosaic_0001>
module attributes {stable_mosaic.version = 11 : i64} {
  func.func @_wrapper_kernel(%arg0: i32, %arg1: memref<16x256xbf16, #tpu.memory_space<vmem>>, %arg2: memref<256x128xbf16, #tpu.memory_space<vmem>>, %arg3: memref<1x128xf32, #tpu.memory_space<vmem>>, %arg4: memref<128x128xbf16, #tpu.memory_space<vmem>>, %arg5: memref<1x128xf32, #tpu.memory_space<vmem>>, %arg6: memref<16x128xf32, #tpu.memory_space<vmem>>) attributes {dimension_semantics = [#tpu.dimension_semantics<arbitrary>], iteration_bounds = array<i64: 1>, scalar_prefetch = 0 : i64, scratch_operands = 0 : i64, tpu.core_type = #tpu.core_type<tc>, window_params = [{transform_indices = @transform_0, window_bounds = array<i64: 16, 256>}, {pipeline_mode = #tpu.pipeline_mode<synchronous>, transform_indices = @transform_1, window_bounds = array<i64: 256, 128>}, {pipeline_mode = #tpu.pipeline_mode<synchronous>, transform_indices = @transform_2, window_bounds = array<i64: 1, 128>}, {pipeline_mode = #tpu.pipeline_mode<synchronous>, transform_indices = @transform_3, window_bounds = array<i64: 128, 128>}, {pipeline_mode = #tpu.pipeline_mode<synchronous>, transform_indices = @transform_4, window_bounds = array<i64: 1, 128>}, {transform_indices = @transform_5, window_bounds = array<i64: 16, 128>}]} {
    %c0 = arith.constant 0 : index
    %c0_0 = arith.constant 0 : index
    %0 = vector.load %arg1[%c0, %c0_0] : memref<16x256xbf16, #tpu.memory_space<vmem>>, vector<16x256xbf16>
    %c0_1 = arith.constant 0 : index
    %c0_2 = arith.constant 0 : index
    %1 = vector.load %arg2[%c0_1, %c0_2] : memref<256x128xbf16, #tpu.memory_space<vmem>>, vector<256x128xbf16>
    %cst = arith.constant dense<0.000000e+00> : vector<16x128xf32>
    %2 = tpu.matmul %0, %1, %cst {dimension_numbers = #tpu.dot_dimension_numbers<[1], [0], [0], [1], [0, 0, 1, 1], [], []>} : vector<16x256xbf16>, vector<256x128xbf16>, vector<16x128xf32> -> vector<16x128xf32>
    %c0_3 = arith.constant 0 : index
    %c0_4 = arith.constant 0 : index
    %3 = vector.load %arg3[%c0_3, %c0_4] : memref<1x128xf32, #tpu.memory_space<vmem>>, vector<1x128xf32>
    %4 = vector.broadcast %3 : vector<1x128xf32> to vector<16x128xf32>
    %5 = arith.addf %2, %4 : vector<16x128xf32>
    %cst_5 = arith.constant 0.000000e+00 : f32
    %6 = vector.broadcast %cst_5 : f32 to vector<16x128xf32>
    %7 = arith.maximumf %5, %6 : vector<16x128xf32>
    %8 = arith.truncf %7 : vector<16x128xf32> to vector<16x128xbf16>
    %c0_6 = arith.constant 0 : index
    %c0_7 = arith.constant 0 : index
    %9 = vector.load %arg4[%c0_6, %c0_7] : memref<128x128xbf16, #tpu.memory_space<vmem>>, vector<128x128xbf16>
    %cst_8 = arith.constant dense<0.000000e+00> : vector<16x128xf32>
    %10 = tpu.matmul %8, %9, %cst_8 {dimension_numbers = #tpu.dot_dimension_numbers<[1], [0], [0], [1], [0, 0, 1, 1], [], []>} : vector<16x128xbf16>, vector<128x128xbf16>, vector<16x128xf32> -> vector<16x128xf32>
    %c0_9 = arith.constant 0 : index
    %c0_10 = arith.constant 0 : index
    %11 = vector.load %arg5[%c0_9, %c0_10] : memref<1x128xf32, #tpu.memory_space<vmem>>, vector<1x128xf32>
    %12 = vector.broadcast %11 : vector<1x128xf32> to vector<16x128xf32>
    %13 = arith.addf %10, %12 : vector<16x128xf32>
    %c0_11 = arith.constant 0 : index
    %c0_12 = arith.constant 0 : index
    %14 = vector.load %arg6[%c0_11, %c0_12] : memref<16x128xf32, #tpu.memory_space<vmem>>, vector<16x128xf32>
    tpu.vector_store %arg6[%c0_11, %c0_12], %13 {strides = array<i32>} : memref<16x128xf32, #tpu.memory_space<vmem>>, vector<16x128xf32>,
    return
  }
  func.func @transform_0(%arg0: i32) -> (i32, i32) {
    %c0_i32 = arith.constant 0 : i32
    %c0_i32_0 = arith.constant 0 : i32
    return %arg0, %c0_i32 : i32, i32
  }
  func.func @transform_1(%arg0: i32) -> (i32, i32) {
    %c0_i32 = arith.constant 0 : i32
    %c0_i32_0 = arith.constant 0 : i32
    %c0_i32_1 = arith.constant 0 : i32
    return %c0_i32, %c0_i32_0 : i32, i32
  }
  func.func @transform_2(%arg0: i32) -> (i32, i32) {
    %c0_i32 = arith.constant 0 : i32
    %c0_i32_0 = arith.constant 0 : i32
    %c0_i32_1 = arith.constant 0 : i32
    return %c0_i32, %c0_i32_0 : i32, i32
  }
  func.func @transform_3(%arg0: i32) -> (i32, i32) {
    %c0_i32 = arith.constant 0 : i32
    %c0_i32_0 = arith.constant 0 : i32
    %c0_i32_1 = arith.constant 0 : i32
    return %c0_i32, %c0_i32_0 : i32, i32
  }
  func.func @transform_4(%arg0: i32) -> (i32, i32) {
    %c0_i32 = arith.constant 0 : i32
    %c0_i32_0 = arith.constant 0 : i32
    %c0_i32_1 = arith.constant 0 : i32
    return %c0_i32, %c0_i32_0 : i32, i32
  }
  func.func @transform_5(%arg0: i32) -> (i32, i32) {
    %c0_i32 = arith.constant 0 : i32
    %c0_i32_0 = arith.constant 0 : i32
    return %arg0, %c0_i32 : i32, i32
  }
}

</mosaic_0001>

<llo_original>
// kernel: tpu_custom_call.1
$region0: #{tpu_custom_call.1}
  #allocation0 [shape = 'u32[]', space=smem, size = 0x4, offset = 0x4, fixed_abs, tag = 'smem constant byte address 0x4 - core index']
  #allocation1 [shape = 'u32[144,128]{1,0:T(1,128)}', space=vmem, size = 0x12000, scoped, tag = 'internal scratch']
  %s0 = inlined_call_operand.hbm [shape: bf16[16,256], index: 0, kind: input, shape index: {}]
  %s1 = inlined_call_operand.hbm [shape: bf16[256,128], index: 1, kind: input, shape index: {}]
  %s2 = inlined_call_operand.vmem [shape: f32[1,128], index: 2, kind: input, shape index: {}]
  %s3 = inlined_call_operand.hbm [shape: bf16[128,128], index: 3, kind: input, shape index: {}]
  %s4 = inlined_call_operand.vmem [shape: f32[1,128], index: 4, kind: input, shape index: {}]
  %s5 = inlined_call_operand.hbm [shape: f32[16,128], index: 5, kind: output, shape index: {}]
  %s6 = sld [smem:[#allocation0]]
  $region42: #{tpu_custom_call.1} parent=0
    _
  %s8 = ssub.s32 1, %s6
  %s9 = scalar_select 0, %s8, %s6
  $region1: #{tpu_custom_call.1} parent=0
    #allocation2 [shape = 'u8[8192]{0}', space=vmem, size = 0x2000, scoped, tag = 'input window, operand 0, single buffered']
    #allocation3 [shape = 's32[1]{0}', space=sflag, size = 0x4, scoped, tag = 'scoped memory for tpu_custom_call.1']
    #allocation4 [shape = 's32[1]{0}', space=sflag, size = 0x4, scoped, tag = 'scoped memory for tpu_custom_call.1']
    #allocation5 [shape = 'u8[65536]{0}', space=vmem, size = 0x10000, scoped, tag = 'input window, operand 1, single buffered']
    #allocation6 [shape = 's32[1]{0}', space=sflag, size = 0x4, scoped, tag = 'scoped memory for tpu_custom_call.1']
    #allocation7 [shape = 'u8[32768]{0}', space=vmem, size = 0x8000, scoped, tag = 'input window, operand 3, single buffered']
    #allocation8 [shape = 'u8[8192]{0}', space=vmem, size = 0x2000, scoped, tag = 'output window, operand 0, single buffered']
    %10 = vsyncpa [#allocation3], 0
    %11 = vsyncpa [#allocation6], 0
    %12 = vsyncpa [#allocation4], 0
    // Predicated region
    $region2: #{tpu_custom_call.1} parent=1 // pred_check
      _
    $region3: #{tpu_custom_call.1} parent=1 // pred_check_branch
      %14 = sbr.rel (0) target = $region5
    $region4: #{tpu_custom_call.1} parent=1 // pred_region
      %s16 = ssub.s32 256, 256
      %17 = vsyncadd [#allocation3], %s16
      %s18 = sshll.u32 [#allocation2], 4
      %s19 = int_to_ptr.vmem [resolvable:$true] %s18
      %24 = dma.hbm_to_vmem [thread:$0]  %s0, 256, %s19, [#allocation3], 128, 128, 8
    $region5: #{tpu_custom_call.1} parent=1 // pred_fallthru
      _
    // Predicated region
    $region6: #{tpu_custom_call.1} parent=1 // pred_check
      _
    $region7: #{tpu_custom_call.1} parent=1 // pred_check_branch
      %26 = sbr.rel (0) target = $region9
    $region8: #{tpu_custom_call.1} parent=1 // pred_region
      %s28 = ssub.s32 2048, 2048
      %29 = vsyncadd [#allocation6], %s28
      %s30 = sshll.u32 [#allocation5], 4
      %s31 = int_to_ptr.vmem [resolvable:$true] %s30
      %36 = dma.hbm_to_vmem [thread:$0]  %s1, 2048, %s31, [#allocation6], 64, 64, 4
    $region9: #{tpu_custom_call.1} parent=1 // pred_fallthru
      _
    // Predicated region
    $region10: #{tpu_custom_call.1} parent=1 // pred_check
      _
    $region11: #{tpu_custom_call.1} parent=1 // pred_check_branch
      %38 = sbr.rel (0) target = $region13
    $region12: #{tpu_custom_call.1} parent=1 // pred_region
      _
    $region13: #{tpu_custom_call.1} parent=1 // pred_fallthru
      _
    // Predicated region
    $region14: #{tpu_custom_call.1} parent=1 // pred_check
      _
    $region15: #{tpu_custom_call.1} parent=1 // pred_check_branch
      %40 = sbr.rel (0) target = $region17
    $region16: #{tpu_custom_call.1} parent=1 // pred_region
      %s42 = ssub.s32 1024, 1024
      %43 = vsyncadd [#allocation6], %s42
      %s44 = sshll.u32 [#allocation7], 4
      %s45 = int_to_ptr.vmem [resolvable:$true] %s44
      %50 = dma.hbm_to_vmem [thread:$0]  %s3, 1024, %s45, [#allocation6], 64, 64, 4
    $region17: #{tpu_custom_call.1} parent=1 // pred_fallthru
      _
    // Predicated region
    $region18: #{tpu_custom_call.1} parent=1 // pred_check
      _
    $region19: #{tpu_custom_call.1} parent=1 // pred_check_branch
      %52 = sbr.rel (0) target = $region21
    $region20: #{tpu_custom_call.1} parent=1 // pred_region
      _
    $region21: #{tpu_custom_call.1} parent=1 // pred_fallthru
      _
    // Predicated region
    $region22: #{tpu_custom_call.1} parent=1 // pred_check
      _
    $region23: #{tpu_custom_call.1} parent=1 // pred_check_branch
      %54 = sbr.rel (0) target = $region25
    $region24: #{tpu_custom_call.1} parent=1 // pred_region
      %55 = dma.done [#allocation3], 256
    $region25: #{tpu_custom_call.1} parent=1 // pred_fallthru
      _
    // Predicated region
    $region26: #{tpu_custom_call.1} parent=1 // pred_check
      _
    $region27: #{tpu_custom_call.1} parent=1 // pred_check_branch
      %57 = sbr.rel (0) target = $region29
    $region28: #{tpu_custom_call.1} parent=1 // pred_region
      %58 = dma.done [#allocation6], 2048
    $region29: #{tpu_custom_call.1} parent=1 // pred_fallthru
      _
    // Predicated region
    $region30: #{tpu_custom_call.1} parent=1 // pred_check
      _
    $region31: #{tpu_custom_call.1} parent=1 // pred_check_branch
      %60 = sbr.rel (0) target = $region33
    $region32: #{tpu_custom_call.1} parent=1 // pred_region
      %61 = dma.done [#allocation6], 1024
    $region33: #{tpu_custom_call.1} parent=1 // pred_fallthru
      _
    %v63 = vld [vmem:[#allocation2] sm:$0xff]
    %v64 = vld [vmem:[#allocation2 + $0x8] sm:$0xff]
    %v65 = vld [vmem:[#allocation5] sm:$0xf]
    %v66 = vld [vmem:[#allocation5 + $0x4] sm:$0xf]
    %v67 = vld [vmem:[#allocation5 + $0x8] sm:$0xf]
    %v68 = vld [vmem:[#allocation5 + $0xc] sm:$0xf]
    %v69 = vld [vmem:[#allocation5 + $0x10] sm:$0xf]
    %v70 = vld [vmem:[#allocation5 + $0x14] sm:$0xf]
    %v71 = vld [vmem:[#allocation5 + $0x18] sm:$0xf]
    %v72 = vld [vmem:[#allocation5 + $0x1c] sm:$0xf]
    %v73 = vld [vmem:[#allocation5 + $0x20] sm:$0xf]
    %v74 = vld [vmem:[#allocation5 + $0x24] sm:$0xf]
    %v75 = vld [vmem:[#allocation5 + $0x28] sm:$0xf]
    %v76 = vld [vmem:[#allocation5 + $0x2c] sm:$0xf]
    %v77 = vld [vmem:[#allocation5 + $0x30] sm:$0xf]
    %v78 = vld [vmem:[#allocation5 + $0x34] sm:$0xf]
    %v79 = vld [vmem:[#allocation5 + $0x38] sm:$0xf]
    %v80 = vld [vmem:[#allocation5 + $0x3c] sm:$0xf]
    %v81 = vld [vmem:[#allocation5 + $0x40] sm:$0xf]
    %v82 = vld [vmem:[#allocation5 + $0x44] sm:$0xf]
    %v83 = vld [vmem:[#allocation5 + $0x48] sm:$0xf]
    %v84 = vld [vmem:[#allocation5 + $0x4c] sm:$0xf]
    %v85 = vld [vmem:[#allocation5 + $0x50] sm:$0xf]
    %v86 = vld [vmem:[#allocation5 + $0x54] sm:$0xf]
    %v87 = vld [vmem:[#allocation5 + $0x58] sm:$0xf]
    %v88 = vld [vmem:[#allocation5 + $0x5c] sm:$0xf]
    %v89 = vld [vmem:[#allocation5 + $0x60] sm:$0xf]
    %v90 = vld [vmem:[#allocation5 + $0x64] sm:$0xf]
    %v91 = vld [vmem:[#allocation5 + $0x68] sm:$0xf]
    %v92 = vld [vmem:[#allocation5 + $0x6c] sm:$0xf]
    %v93 = vld [vmem:[#allocation5 + $0x70] sm:$0xf]
    %v94 = vld [vmem:[#allocation5 + $0x74] sm:$0xf]
    %v95 = vld [vmem:[#allocation5 + $0x78] sm:$0xf]
    %v96 = vld [vmem:[#allocation5 + $0x7c] sm:$0xf]
    %v97 = vld [vmem:[%s2] sm:$0x1]
    %v99 = vlaneseq
    %v100 = vshrl.u32 %v99, 7
    %v101 = vsub.s32 0, %v100
    %v102 = vrot.slane %v97, %v101
    %v106 = vunpack.c.l.b16 %v63
    %v107 = vunpack.c.h.b16 %v63
    %v108 = vunpack.c.l.b16 %v64
    %v109 = vunpack.c.h.b16 %v64
    %v110 = vpack.c.b16 %v108, %v106
    %v111 = vpack.c.b16 %v109, %v107
    %v146 = vunpack.c.l.b16 %v65
    %v147 = vunpack.c.l.b16 %v66
    %v148 = vunpack.c.l.b16 %v67
    %v149 = vunpack.c.l.b16 %v68
    %v150 = vunpack.c.l.b16 %v69
    %v151 = vunpack.c.l.b16 %v70
    %v152 = vunpack.c.l.b16 %v71
    %v153 = vunpack.c.l.b16 %v72
    %v154 = vunpack.c.l.b16 %v73
    %v155 = vunpack.c.l.b16 %v74
    %v156 = vunpack.c.l.b16 %v75
    %v157 = vunpack.c.l.b16 %v76
    %v158 = vunpack.c.l.b16 %v77
    %v159 = vunpack.c.l.b16 %v78
    %v160 = vunpack.c.l.b16 %v79
    %v161 = vunpack.c.l.b16 %v80
    %v162 = vunpack.c.l.b16 %v81
    %v163 = vunpack.c.l.b16 %v82
    %v164 = vunpack.c.l.b16 %v83
    %v165 = vunpack.c.l.b16 %v84
    %v166 = vunpack.c.l.b16 %v85
    %v167 = vunpack.c.l.b16 %v86
    %v168 = vunpack.c.l.b16 %v87
    %v169 = vunpack.c.l.b16 %v88
    %v170 = vunpack.c.l.b16 %v89
    %v171 = vunpack.c.l.b16 %v90
    %v172 = vunpack.c.l.b16 %v91
    %v173 = vunpack.c.l.b16 %v92
    %v174 = vunpack.c.l.b16 %v93
    %v175 = vunpack.c.l.b16 %v94
    %v176 = vunpack.c.l.b16 %v95
    %v177 = vunpack.c.l.b16 %v96
    %v178 = vpack.c.b16 %v147, %v146
    %v179 = vpack.c.b16 %v149, %v148
    %v180 = vpack.c.b16 %v151, %v150
    %v181 = vpack.c.b16 %v153, %v152
    %v182 = vpack.c.b16 %v155, %v154
    %v183 = vpack.c.b16 %v157, %v156
    %v184 = vpack.c.b16 %v159, %v158
    %v185 = vpack.c.b16 %v161, %v160
    %v186 = vpack.c.b16 %v163, %v162
    %v187 = vpack.c.b16 %v165, %v164
    %v188 = vpack.c.b16 %v167, %v166
    %v189 = vpack.c.b16 %v169, %v168
    %v190 = vpack.c.b16 %v171, %v170
    %v191 = vpack.c.b16 %v173, %v172
    %v192 = vpack.c.b16 %v175, %v174
    %v193 = vpack.c.b16 %v177, %v176
    %210 = vmatprep.subr.bf16.mxu0 0
    %211 = vmatpush1.bf16.msra.mxu0 %v178
    %212 = vmatprep.subr.bf16.mxu0 0
    %213 = vmatpush1.bf16.msra.mxu0 %v179
    %214 = vmatprep.subr.bf16.mxu0 0
    %215 = vmatpush1.bf16.msra.mxu0 %v180
    %216 = vmatprep.subr.bf16.mxu0 0
    %217 = vmatpush1.bf16.msra.mxu0 %v181
    %218 = vmatprep.subr.bf16.mxu0 0
    %219 = vmatpush1.bf16.msra.mxu0 %v182
    %220 = vmatprep.subr.bf16.mxu0 0
    %221 = vmatpush1.bf16.msra.mxu0 %v183
    %222 = vmatprep.subr.bf16.mxu0 0
    %223 = vmatpush1.bf16.msra.mxu0 %v184
    %224 = vmatprep.subr.bf16.mxu0 0
    %225 = vmatpush1.bf16.msra.mxu0 %v185
    %226 = vmatprep.subr.bf16.mxu0 0
    %227 = vmatpush1.bf16.msra.mxu0 %v186
    %228 = vmatprep.subr.bf16.mxu0 0
    %229 = vmatpush1.bf16.msra.mxu0 %v187
    %230 = vmatprep.subr.bf16.mxu0 0
    %231 = vmatpush1.bf16.msra.mxu0 %v188
    %232 = vmatprep.subr.bf16.mxu0 0
    %233 = vmatpush1.bf16.msra.mxu0 %v189
    %234 = vmatprep.subr.bf16.mxu0 0
    %235 = vmatpush1.bf16.msra.mxu0 %v190
    %236 = vmatprep.subr.bf16.mxu0 0
    %237 = vmatpush1.bf16.msra.mxu0 %v191
    %238 = vmatprep.subr.bf16.mxu0 0
    %239 = vmatpush1.bf16.msra.mxu0 %v192
    %240 = vmatprep.subr.bf16.mxu0 0
    %241 = vmatpush1.bf16.msra.mxu0 %v193
    %242 = vmatprep.mubr.bf16.mxu0 %v111
    %243 = vmatmul.mubr.bf16.gmra.mrb[0].mxu0 %v110
    %v244 = vpop.f32.mrb[0].mxu0
    %v245 = vadd.f32 %v102, %v244
    %v246 = vpop.f32.mrb[0].mxu0
    %v247 = vpop.f32.mrb[0].mxu0
    %v248 = vadd.f32 %v102, %v247
    %v249 = vpop.f32.mrb[0].mxu0
    %250 = vdwg.mxu0
    %v251 = vmax.f32 %v245, 0.0
    %v252 = vmax.f32 %v248, 0.0
    %v253 = vpack.c.bf16 %v252, %v251
    %v254 = vld [vmem:[#allocation7] sm:$0xf]
    %v255 = vld [vmem:[#allocation7 + $0x4] sm:$0xf]
    %v256 = vld [vmem:[#allocation7 + $0x8] sm:$0xf]
    %v257 = vld [vmem:[#allocation7 + $0xc] sm:$0xf]
    %v258 = vld [vmem:[#allocation7 + $0x10] sm:$0xf]
    %v259 = vld [vmem:[#allocation7 + $0x14] sm:$0xf]
    %v260 = vld [vmem:[#allocation7 + $0x18] sm:$0xf]
    %v261 = vld [vmem:[#allocation7 + $0x1c] sm:$0xf]
    %v262 = vld [vmem:[#allocation7 + $0x20] sm:$0xf]
    %v263 = vld [vmem:[#allocation7 + $0x24] sm:$0xf]
    %v264 = vld [vmem:[#allocation7 + $0x28] sm:$0xf]
    %v265 = vld [vmem:[#allocation7 + $0x2c] sm:$0xf]
    %v266 = vld [vmem:[#allocation7 + $0x30] sm:$0xf]
    %v267 = vld [vmem:[#allocation7 + $0x34] sm:$0xf]
    %v268 = vld [vmem:[#allocation7 + $0x38] sm:$0xf]
    %v269 = vld [vmem:[#allocation7 + $0x3c] sm:$0xf]
    %v270 = vld [vmem:[%s4] sm:$0x1]
    %v272 = vlaneseq
    %v273 = vshrl.u32 %v272, 7
    %v274 = vsub.s32 0, %v273
    %v275 = vrot.slane %v270, %v274
    %v293 = vunpack.c.l.b16 %v254
    %v294 = vunpack.c.l.b16 %v255
    %v295 = vunpack.c.l.b16 %v256
    %v296 = vunpack.c.l.b16 %v257
    %v297 = vunpack.c.l.b16 %v258
    %v298 = vunpack.c.l.b16 %v259
    %v299 = vunpack.c.l.b16 %v260
    %v300 = vunpack.c.l.b16 %v261
    %v301 = vunpack.c.l.b16 %v262
    %v302 = vunpack.c.l.b16 %v263
    %v303 = vunpack.c.l.b16 %v264
    %v304 = vunpack.c.l.b16 %v265
    %v305 = vunpack.c.l.b16 %v266
    %v306 = vunpack.c.l.b16 %v267
    %v307 = vunpack.c.l.b16 %v268
    %v308 = vunpack.c.l.b16 %v269
    %v309 = vpack.c.b16 %v294, %v293
    %v310 = vpack.c.b16 %v296, %v295
    %v311 = vpack.c.b16 %v298, %v297
    %v312 = vpack.c.b16 %v300, %v299
    %v313 = vpack.c.b16 %v302, %v301
    %v314 = vpack.c.b16 %v304, %v303
    %v315 = vpack.c.b16 %v306, %v305
    %v316 = vpack.c.b16 %v308, %v307
    %325 = vmatprep.subr.bf16.mxu0 0
    %326 = vmatpush1.bf16.msra.mxu0 %v309
    %327 = vmatprep.subr.bf16.mxu0 0
    %328 = vmatpush1.bf16.msra.mxu0 %v310
    %329 = vmatprep.subr.bf16.mxu0 0
    %330 = vmatpush1.bf16.msra.mxu0 %v311
    %331 = vmatprep.subr.bf16.mxu0 0
    %332 = vmatpush1.bf16.msra.mxu0 %v312
    %333 = vmatprep.subr.bf16.mxu0 0
    %334 = vmatpush1.bf16.msra.mxu0 %v313
    %335 = vmatprep.subr.bf16.mxu0 0
    %336 = vmatpush1.bf16.msra.mxu0 %v314
    %337 = vmatprep.subr.bf16.mxu0 0
    %338 = vmatpush1.bf16.msra.mxu0 %v315
    %339 = vmatprep.subr.bf16.mxu0 0
    %340 = vmatpush1.bf16.msra.mxu0 %v316
    %341 = vmatprep.subr.bf16.mxu0 0
    %342 = vmatpush1.bf16.msra.mxu0 0
    %343 = vmatprep.subr.bf16.mxu0 0
    %344 = vmatpush1.bf16.msra.mxu0 0
    %345 = vmatprep.subr.bf16.mxu0 0
    %346 = vmatpush1.bf16.msra.mxu0 0
    %347 = vmatprep.subr.bf16.mxu0 0
    %348 = vmatpush1.bf16.msra.mxu0 0
    %349 = vmatprep.subr.bf16.mxu0 0
    %350 = vmatpush1.bf16.msra.mxu0 0
    %351 = vmatprep.subr.bf16.mxu0 0
    %352 = vmatpush1.bf16.msra.mxu0 0
    %353 = vmatprep.subr.bf16.mxu0 0
    %354 = vmatpush1.bf16.msra.mxu0 0
    %355 = vmatprep.subr.bf16.mxu0 0
    %356 = vmatpush1.bf16.msra.mxu0 0
    %357 = vmatprep.mubr.bf16.mxu0 0
    %358 = vmatmul.mubr.bf16.gmra.mrb[0].mxu0 %v253
    %v359 = vpop.f32.mrb[0].mxu0
    %v360 = vadd.f32 %v275, %v359
    %v361 = vpop.f32.mrb[0].mxu0
    %v362 = vpop.f32.mrb[0].mxu0
    %v363 = vadd.f32 %v275, %v362
    %v364 = vpop.f32.mrb[0].mxu0
    %365 = vdwg.mxu0
    %366 = vst [vmem:[#allocation8] sm:$0xff] %v360
    %367 = vst [vmem:[#allocation8 + $0x8] sm:$0xff] %v363
    // Predicated region
    $region34: #{tpu_custom_call.1} parent=1 // pred_check
      _
    $region35: #{tpu_custom_call.1} parent=1 // pred_check_branch
      %369 = sbr.rel (0) target = $region37
    $region36: #{tpu_custom_call.1} parent=1 // pred_region
      %s371 = ssub.s32 256, 256
      %372 = vsyncadd [#allocation4], %s371
      %s373 = sshll.u32 [#allocation8], 4
      %s374 = int_to_ptr.vmem [resolvable:$true] %s373
      %379 = dma.vmem_to_hbm [thread:$0]  %s374, 256, %s5, [#allocation4], 128, 128, 8
    $region37: #{tpu_custom_call.1} parent=1 // pred_fallthru
      _
    // Predicated region
    $region38: #{tpu_custom_call.1} parent=1 // pred_check
      _
    $region39: #{tpu_custom_call.1} parent=1 // pred_check_branch
      %381 = sbr.rel (0) target = $region41
    $region40: #{tpu_custom_call.1} parent=1 // pred_region
      %382 = dma.done [#allocation4], 256
    $region41: #{tpu_custom_call.1} parent=1 // pred_fallthru
      _
    %383 = vsyncpa [#allocation3], 1
    %384 = vsyncpa [#allocation6], 1
    %385 = vsyncpa [#allocation4], 1

</llo_original>
